<compile_context>
chip_gen: v5e
topology: v5e:2x2
jax: 0.10.0
libtpu: 0.0.40
codegen_flags: <defaults>
</compile_context>

<pallas_src>
import jax
import jax.numpy as jnp
import numpy as np
from jax.experimental import pallas as pl
from jax.experimental.pallas import tpu as pltpu


def _round_up(x, m):
    return ((x + m - 1) // m) * m


def _vmem_capacity_bytes():
    """Per-core VMEM capacity; conservative fallback if the query is unavailable."""
    try:
        cap = int(pltpu.get_tpu_info().vmem_capacity_bytes)
        return max(32 * 1024 * 1024, min(cap, 128 * 1024 * 1024))
    except Exception:
        return 64 * 1024 * 1024  # v7x per-TensorCore VMEM; safe on v5e/v6e too


def _quad_kernel(idx_ref, x_ref, o_ref, s_ref):
    """out_tile = (x @ S_i) * (x @ S_j); S built in-kernel once per P block."""
    d = x_ref.shape[-1]
    tp = o_ref.shape[-1]

    # P is the outer grid axis; the inner (batch) axis revisits the same P
    # block, so generate the one-hot gather matrix only at inner index 0.
    @pl.when(pl.program_id(1) == 0)
    def _():
        rows = jax.lax.broadcasted_iota(jnp.int32, (d, tp), 0)
        idx = idx_ref[...]                                   # (2, tp) int32
        s_ref[:, :tp] = (rows == idx[0:1, :]).astype(jnp.float32)
        s_ref[:, tp:] = (rows == idx[1:2, :]).astype(jnp.float32)

    # One fused MXU matmul gathers both factors (exact: S is one-hot f32).
    ab = jnp.dot(x_ref[...], s_ref[...], preferred_element_type=jnp.float32)
    o_ref[...] = (ab[:, :tp] * ab[:, tp:]).astype(o_ref.dtype)


def _choose_p_tiling(out_dim, d, budget_bytes, target_tile_p):
    """Lane-dense (multiple-of-128) output-column tile, adaptive to d."""
    p128 = _round_up(out_dim, 128)
    d_sub = _round_up(d, 8)
    # Selector scratch is (d, 2*tile_p) f32 (single copy): keep it <= budget/4.
    max_tp = max(128, (((budget_bytes // 4) // (d_sub * 8)) // 128) * 128)
    tile_p = min(target_tile_p, p128, max_tp)
    # Prefer >= 2 P blocks so the parallel P axis can shard across v7x's 2 cores.
    if tile_p >= p128 and p128 >= 256:
        tile_p = max(128, _round_up(p128 // 2, 128))
    n_p_tiles = -(-out_dim // tile_p)
    return tile_p, n_p_tiles


def _choose_block_b(nb, d, tile_p, budget_bytes, max_block_b):
    """Largest multiple-of-8 batch tile fitting the VMEM budget (incl. `ab`)."""
    d_lanes = _round_up(d, 128)                 # x tile is lane-padded in VMEM
    d_sub = _round_up(d, 8)
    sel_bytes = d_sub * 2 * tile_p * 4          # selector scratch (single copy)
    idx_bytes = 2 * 8 * tile_p * 4              # (2, tile_p) i32, double-buffered
    per_row = 4 * (2 * d_lanes                  # x tile, double-buffered
                   + 2 * tile_p                 # out tile, double-buffered
                   + 2 * tile_p)                # `ab` (block_b, 2*tile_p) f32 intermediate
    avail = budget_bytes - sel_bytes - idx_bytes
    bb = min(max_block_b, max(8, avail // per_row))
    bb = min(bb, _round_up(max(nb, 1), 8))
    return max(8, (bb // 8) * 8)


def make_fixed_quadratic_layer(in_dim, *, max_block_b=2048, target_tile_p=2048):
    """Returns a jitted fn: x (..., d) f32 -> (..., d*(d+1)/2) f32."""
    d = int(in_dim)
    out_dim = d * (d + 1) // 2

    vmem_cap = _vmem_capacity_bytes()
    budget = int(vmem_cap * 0.55)               # tiling budget
    vmem_limit = int(vmem_cap * 0.80)           # scoped limit handed to Mosaic

    tile_p, n_p_tiles = _choose_p_tiling(out_dim, d, budget, target_tile_p)
    p_pad = tile_p * n_p_tiles

    # Index vectors (i_k, j_k) with out[..., k] = x[..., i_k] * x[..., j_k],
    # matching torch: diagonal first, then tril(offset=-1) in row-major order.
    rows, cols = np.tril_indices(d, k=-1)
    idx_np = np.zeros((2, p_pad), np.int32)     # padded cols -> index 0 (masked on store)
    idx_np[0, :out_dim] = np.concatenate([np.arange(d), rows])
    idx_np[1, :out_dim] = np.concatenate([np.arange(d), cols])
    idx = jnp.asarray(idx_np)

    @jax.jit
    def forward(x):
        batch_shape = x.shape[:-1]
        xb = x.reshape(-1, d).astype(jnp.float32)
        nb = xb.shape[0]
        block_b = _choose_block_b(nb, d, tile_p, budget, max_block_b)
        n_b_tiles = pl.cdiv(nb, block_b)
        grid = (n_p_tiles, n_b_tiles)           # P outermost, batch innermost

        cost = pl.CostEstimate(
            flops=2 * nb * d * 2 * p_pad,
            transcendentals=0,
            bytes_accessed=4 * (n_p_tiles * nb * d     # x re-read per P block
                                + nb * out_dim         # output writeback
                                + 2 * p_pad),          # index vectors (once)
        )

        out = pl.pallas_call(
            _quad_kernel,
            out_shape=jax.ShapeDtypeStruct((nb, out_dim), jnp.float32),
            grid_spec=pltpu.PrefetchScalarGridSpec(
                num_scalar_prefetch=0,
                grid=grid,
                in_specs=[
                    # (i_k, j_k) index pair for output block p (inner-loop invariant).
                    pl.BlockSpec((2, tile_p), lambda p, i: (0, p)),
                    # x tile over batch; full (small) feature axis resident.
                    pl.BlockSpec((block_b, d), lambda p, i: (i, 0)),
                ],
                out_specs=pl.BlockSpec((block_b, tile_p), lambda p, i: (i, p)),
                scratch_shapes=[pltpu.VMEM((d, 2 * tile_p), jnp.float32)],
            ),
            compiler_params=pltpu.CompilerParams(
                # Batch axis is "arbitrary": selector scratch is generated at inner
                # index 0 and reused, so those iterations are not independent.
                dimension_semantics=("parallel", "arbitrary"),
                vmem_limit_bytes=vmem_limit,
            ),
            cost_estimate=cost,
        )(idx, xb)

        return out.reshape(*batch_shape, out_dim)

    return forward


def _reference(x, in_dim):
    """Pure-JAX reference mirroring the PyTorch forward."""
    outer = jnp.einsum("...i,...j->...ij", x, x)
    diag = jnp.diagonal(outer, axis1=-2, axis2=-1)
    rows, cols = np.tril_indices(in_dim, k=-1)
    off = outer[..., rows, cols]
    return jnp.concatenate([diag, off], axis=-1)


if __name__ == "__main__":
    key0, key1 = jax.random.split(jax.random.PRNGKey(0))

    # Case 1: (B, d) = (16, 8) -> out (16, 36).
    B, d = 16, 8
    x = jax.random.normal(key0, (B, d), dtype=jnp.float32)
    layer = make_fixed_quadratic_layer(d)
    out = jax.block_until_ready(layer(x))
    ref = _reference(x, d)
    assert out.shape == (B, d * (d + 1) // 2)
    np.testing.assert_allclose(np.asarray(out), np.asarray(ref), rtol=1e-5, atol=1e-5)

    # Case 2: ragged batch (3*7 = 21 rows, not a multiple of 8) and
    # out_dim = 55 (not a multiple of 128) to exercise masked edge blocks.
    d2 = 10
    x2 = jax.random.normal(key1, (3, 7, d2), dtype=jnp.float32)
    layer2 = make_fixed_quadratic_layer(d2)
    out2 = jax.block_until_ready(layer2(x2))
    ref2 = _reference(x2, d2)
    assert out2.shape == (3, 7, d2 * (d2 + 1) // 2)
    np.testing.assert_allclose(np.asarray(out2), np.asarray(ref2), rtol=1e-5, atol=1e-5)

    print("KERNEL_OK")
</pallas_src>

<mosaic_0001>
module attributes {stable_mosaic.version = 11 : i64} {
  func.func @_quad_kernel(%arg0: i32, %arg1: i32, %arg2: memref<2x128xi32, #tpu.memory_space<vmem>>, %arg3: memref<16x8xf32, #tpu.memory_space<vmem>>, %arg4: memref<16x128xf32, #tpu.memory_space<vmem>>, %arg5: memref<8x256xf32, #tpu.memory_space<vmem>>) attributes {dimension_semantics = [#tpu.dimension_semantics<parallel>, #tpu.dimension_semantics<arbitrary>], iteration_bounds = array<i64: 1, 1>, scalar_prefetch = 0 : i64, scratch_operands = 1 : i64, tpu.core_type = #tpu.core_type<tc>, window_params = [{transform_indices = @transform_0, window_bounds = array<i64: 2, 128>}, {transform_indices = @transform_1, window_bounds = array<i64: 16, 8>}, {transform_indices = @transform_2, window_bounds = array<i64: 16, 128>}]} {
    %c0_i32 = arith.constant 0 : i32
    %0 = arith.cmpi eq, %arg1, %c0_i32 : i32
    %1 = arith.extui %0 : i1 to i32
    %c0_i32_0 = arith.constant 0 : i32
    %2 = arith.cmpi ne, %1, %c0_i32_0 : i32
    scf.if %2 {
      %10 = tpu.iota {dimensions = array<i32: 0>} : vector<8x128xi32>
      %c0_6 = arith.constant 0 : index
      %c0_7 = arith.constant 0 : index
      %11 = vector.load %arg2[%c0_6, %c0_7] : memref<2x128xi32, #tpu.memory_space<vmem>>, vector<2x128xi32>
      %12 = vector.extract_strided_slice %11 {offsets = [0, 0], sizes = [1, 128], strides = [1, 1]} : vector<2x128xi32> to vector<1x128xi32>
      %13 = vector.broadcast %12 : vector<1x128xi32> to vector<8x128xi32>
      %14 = arith.cmpi eq, %10, %13 : vector<8x128xi32>
      %15 = arith.extui %14 : vector<8x128xi1> to vector<8x128xi32>
      %16 = arith.sitofp %15 : vector<8x128xi32> to vector<8x128xf32>
      %c0_8 = arith.constant 0 : index
      %c0_9 = arith.constant 0 : index
      %17 = vector.load %arg5[%c0_8, %c0_9] : memref<8x256xf32, #tpu.memory_space<vmem>>, vector<8x128xf32>
      tpu.vector_store %arg5[%c0_8, %c0_9], %16 {strides = array<i32>} : memref<8x256xf32, #tpu.memory_space<vmem>>, vector<8x128xf32>,
      %18 = vector.extract_strided_slice %11 {offsets = [1, 0], sizes = [1, 128], strides = [1, 1]} : vector<2x128xi32> to vector<1x128xi32>
      %19 = vector.broadcast %18 : vector<1x128xi32> to vector<8x128xi32>
      %20 = arith.cmpi eq, %10, %19 : vector<8x128xi32>
      %21 = arith.extui %20 : vector<8x128xi1> to vector<8x128xi32>
      %22 = arith.sitofp %21 : vector<8x128xi32> to vector<8x128xf32>
      %c0_10 = arith.constant 0 : index
      %c128 = arith.constant 128 : index
      %23 = vector.load %arg5[%c0_10, %c128] : memref<8x256xf32, #tpu.memory_space<vmem>>, vector<8x128xf32>
      tpu.vector_store %arg5[%c0_10, %c128], %22 {strides = array<i32>} : memref<8x256xf32, #tpu.memory_space<vmem>>, vector<8x128xf32>,
    } else {
    }
    %c0 = arith.constant 0 : index
    %c0_1 = arith.constant 0 : index
    %3 = vector.load %arg3[%c0, %c0_1] : memref<16x8xf32, #tpu.memory_space<vmem>>, vector<16x8xf32>
    %c0_2 = arith.constant 0 : index
    %c0_3 = arith.constant 0 : index
    %4 = vector.load %arg5[%c0_2, %c0_3] : memref<8x256xf32, #tpu.memory_space<vmem>>, vector<8x256xf32>
    %cst = arith.constant dense<0.000000e+00> : vector<16x256xf32>
    %5 = tpu.matmul %3, %4, %cst {dimension_numbers = #tpu.dot_dimension_numbers<[1], [0], [0], [1], [0, 0, 1, 1], [], []>} : vector<16x8xf32>, vector<8x256xf32>, vector<16x256xf32> -> vector<16x256xf32>
    %6 = vector.extract_strided_slice %5 {offsets = [0, 0], sizes = [16, 128], strides = [1, 1]} : vector<16x256xf32> to vector<16x128xf32>
    %7 = vector.extract_strided_slice %5 {offsets = [0, 128], sizes = [16, 128], strides = [1, 1]} : vector<16x256xf32> to vector<16x128xf32>
    %8 = arith.mulf %6, %7 : vector<16x128xf32>
    %c0_4 = arith.constant 0 : index
    %c0_5 = arith.constant 0 : index
    %9 = vector.load %arg4[%c0_4, %c0_5] : memref<16x128xf32, #tpu.memory_space<vmem>>, vector<16x128xf32>
    tpu.vector_store %arg4[%c0_4, %c0_5], %8 {strides = array<i32>} : memref<16x128xf32, #tpu.memory_space<vmem>>, vector<16x128xf32>,
    return
  }
  func.func @transform_0(%arg0: i32, %arg1: i32) -> (i32, i32) {
    %c0_i32 = arith.constant 0 : i32
    %c0_i32_0 = arith.constant 0 : i32
    return %c0_i32, %arg0 : i32, i32
  }
  func.func @transform_1(%arg0: i32, %arg1: i32) -> (i32, i32) {
    %c0_i32 = arith.constant 0 : i32
    %c0_i32_0 = arith.constant 0 : i32
    return %arg1, %c0_i32 : i32, i32
  }
  func.func @transform_2(%arg0: i32, %arg1: i32) -> (i32, i32) {
    %c0_i32 = arith.constant 0 : i32
    return %arg1, %arg0 : i32, i32
  }
}

</mosaic_0001>

<llo_original>
// kernel: forward.1
$region0: #{forward.1}
  #allocation0 [shape = 'u32[]', space=smem, size = 0x4, offset = 0x4, fixed_abs, tag = 'smem constant byte address 0x4 - core index']
  #allocation1 [shape = 'u32[72,128]{1,0:T(1,128)}', space=vmem, size = 0x9000, scoped, tag = 'internal scratch']
  #allocation2 [shape = 'f32[8,256]{1,0:T(8,128)}', space=vmem, size = 0x2000, scoped, tag = 'scratch operand']
  %s0 = inlined_call_operand.vmem [shape: s32[2,128], index: 0, kind: input, shape index: {}]
  %s1 = inlined_call_operand.vmem [shape: f32[16,8], index: 1, kind: input, shape index: {}]
  %s2 = inlined_call_operand.hbm [shape: f32[16,36], index: 2, kind: output, shape index: {}]
  %s3 = sld [smem:[#allocation0]]
  $region22: #{forward.1} parent=0
    _
  %s5 = ssub.s32 1, %s3
  %s6 = scalar_select 0, %s5, %s3
  $region1: #{forward.1} parent=0
    #allocation3 [shape = 'u8[8192]{0}', space=vmem, size = 0x2000, scoped, tag = 'output window, operand 0, single buffered']
    #allocation4 [shape = 's32[1]{0}', space=sflag, size = 0x4, scoped, tag = 'scoped memory for forward.1']
    %7 = vsyncpa [#allocation4], 0
    // Predicated region
    $region2: #{forward.1} parent=1 // pred_check
      _
    $region3: #{forward.1} parent=1 // pred_check_branch
      %9 = sbr.rel (0) target = $region5
    $region4: #{forward.1} parent=1 // pred_region
      _
    $region5: #{forward.1} parent=1 // pred_fallthru
      _
    // Predicated region
    $region6: #{forward.1} parent=1 // pred_check
      _
    $region7: #{forward.1} parent=1 // pred_check_branch
      %11 = sbr.rel (0) target = $region9
    $region8: #{forward.1} parent=1 // pred_region
      _
    $region9: #{forward.1} parent=1 // pred_fallthru
      _
    %p12 = scmp.eq.s32.totalorder 0, 0
    // Predicated region
    $region10: #{forward.1} parent=1 // pred_check
      %p13 = pneg %p12
    $region11: #{forward.1} parent=1 // pred_check_branch
      %15 = sbr.rel (%p13) target = $region13
    $region12: #{forward.1} parent=1 // pred_region
      %v16 = vlaneseq
      %v17 = vshrl.u32 %v16, 7
      %v18 = vld [vmem:[%s0] sm:$0x3]
      %v19 = vperm.slane %v18, 0
      %vm20 = vcmp.eq.s32.totalorder %v17, %v19
      %v21 = vsel %vm20, 1, 0
      %v22 = vcvt.s32.f32 %v21
      %23 = vst [vmem:[#allocation2] sm:$0xff] %v22
      %v24 = vperm.slane %v18, 1
      %vm25 = vcmp.eq.s32.totalorder %v17, %v24
      %v26 = vsel %vm25, 1, 0
      %v27 = vcvt.s32.f32 %v26
      %28 = vst [vmem:[#allocation2 + $0x8] sm:$0xff] %v27
    $region13: #{forward.1} parent=1 // pred_fallthru
      _
    %v29 = vld [vmem:[%s1] sm:$0xff]
    %v30 = vld [vmem:[%s1 + $0x8] sm:$0xff]
    %v31 = vld [vmem:[#allocation2] sm:$0xff]
    %v32 = vld [vmem:[#allocation2 + $0x8] sm:$0xff]
    %vm33 = vcmask 64512
    %v35 = vsel %vm33, %v29, 0
    %v38 = vsel %vm33, %v30, 0
    %40 = vmatpush.msra.mxu0 0.0
    %41 = vmatpush.msra.mxu0 0.0
    %42 = vmatpush.msra.mxu0 0.0
    %43 = vmatpush.msra.mxu0 0.0
    %44 = vmatpush.msra.mxu0 0.0
    %45 = vmatpush.msra.mxu0 0.0
    %46 = vmatpush.msra.mxu0 0.0
    %47 = vmatpush.msra.mxu0 0.0
    %48 = vmatpush.msra.mxu0 0.0
    %49 = vmatpush.msra.mxu0 0.0
    %50 = vmatpush.msra.mxu0 0.0
    %51 = vmatpush.msra.mxu0 0.0
    %52 = vmatpush.msra.mxu0 0.0
    %53 = vmatpush.msra.mxu0 0.0
    %54 = vmatpush.msra.mxu0 0.0
    %55 = vmatpush.msra.mxu0 %v31
    %56 = vmatmul.f32.gmra.mxu0 %v35
    %v57 = vpop.f32.mrf.mxu0
    %v58 = vadd.f32 0.0, %v57
    %59 = vmatmul.f32.gmra.mxu0 %v38
    %v60 = vpop.f32.mrf.mxu0
    %v61 = vadd.f32 0.0, %v60
    %62 = vdwg.mxu0
    %63 = vmatpush.msra.mxu0 0.0
    %64 = vmatpush.msra.mxu0 0.0
    %65 = vmatpush.msra.mxu0 0.0
    %66 = vmatpush.msra.mxu0 0.0
    %67 = vmatpush.msra.mxu0 0.0
    %68 = vmatpush.msra.mxu0 0.0
    %69 = vmatpush.msra.mxu0 0.0
    %70 = vmatpush.msra.mxu0 0.0
    %71 = vmatpush.msra.mxu0 0.0
    %72 = vmatpush.msra.mxu0 0.0
    %73 = vmatpush.msra.mxu0 0.0
    %74 = vmatpush.msra.mxu0 0.0
    %75 = vmatpush.msra.mxu0 0.0
    %76 = vmatpush.msra.mxu0 0.0
    %77 = vmatpush.msra.mxu0 0.0
    %78 = vmatpush.msra.mxu0 %v32
    %79 = vmatmul.f32.gmra.mxu0 %v35
    %v80 = vpop.f32.mrf.mxu0
    %v81 = vadd.f32 0.0, %v80
    %82 = vmatmul.f32.gmra.mxu0 %v38
    %v83 = vpop.f32.mrf.mxu0
    %v84 = vadd.f32 0.0, %v83
    %85 = vdwg.mxu0
    %v86 = vmul.f32 %v58, %v81
    %v87 = vmul.f32 %v61, %v84
    %88 = vst [vmem:[#allocation3] sm:$0xff] %v86
    %89 = vst [vmem:[#allocation3 + $0x8] sm:$0xff] %v87
    // Predicated region
    $region14: #{forward.1} parent=1 // pred_check
      _
    $region15: #{forward.1} parent=1 // pred_check_branch
      %91 = sbr.rel (0) target = $region17
    $region16: #{forward.1} parent=1 // pred_region
      %93 = vsyncadd [#allocation4], 0
      %s94 = sshll.u32 [#allocation3], 4
      %s95 = int_to_ptr.vmem [resolvable:$true] %s94
      %s96 = sshll.u32 %s2, 4
      %s97 = int_to_ptr.hbm [resolvable:$true] %s96
      %102 = dma.vmem_to_hbm [thread:$0]  %s95, 256, %s97, [#allocation4], 128, 128, 8
    $region17: #{forward.1} parent=1 // pred_fallthru
      _
    // Predicated region
    $region18: #{forward.1} parent=1 // pred_check
      _
    $region19: #{forward.1} parent=1 // pred_check_branch
      %104 = sbr.rel (0) target = $region21
    $region20: #{forward.1} parent=1 // pred_region
      %106 = dma.done [#allocation4], 256
    $region21: #{forward.1} parent=1 // pred_fallthru
      _
    %107 = vsyncpa [#allocation4], 1

</llo_original>
